<compile_context>
chip_gen: v6e
topology: v6e:2x2x1
jax: 0.10.0
libtpu: 0.0.40
codegen_flags: <defaults>
</compile_context>

<pallas_src>
import functools

import jax
import jax.numpy as jnp
from jax.experimental import pallas as pl
from jax.experimental.pallas import tpu as pltpu

LANE = 128
SUBLANE = 8
HIDDEN = 256          # torch hidden=200, zero-padded to 2 full lane tiles
OUT_PAD = 128         # lane-aligned width of each output head (means / logvars)


def _round_up(x, m):
    return ((x + m - 1) // m) * m


def _softplus(x):
    # Numerically stable softplus (matches torch.nn.functional.softplus to f32 precision).
    return jnp.maximum(x, 0.0) + jnp.log1p(jnp.exp(-jnp.abs(x)))


def _leaky_relu(x, negative_slope=0.01):
    return jnp.where(x >= 0.0, x, negative_slope * x)


def gaussian_mlp_kernel(
    x_ref,
    in_mean_ref, in_inv_std_ref,
    w0_ref, b0_ref,
    w1_ref, b1_ref,
    w2_ref, b2_ref,
    w3m_ref, b3m_ref,
    w3l_ref, b3l_ref,
    min_lv_ref, max_lv_ref,
    means_ref, logvars_ref,
):
    # Input normalization in f32 (multiply by precomputed 1/std).
    xn = (x_ref[...] - in_mean_ref[...]) * in_inv_std_ref[...]

    # MLP trunk: bf16 operands into the MXU, f32 accumulation, f32 elementwise.
    h = jnp.dot(xn.astype(jnp.bfloat16), w0_ref[...],
                preferred_element_type=jnp.float32) + b0_ref[...]
    h = _leaky_relu(h)
    h = jnp.dot(h.astype(jnp.bfloat16), w1_ref[...],
                preferred_element_type=jnp.float32) + b1_ref[...]
    h = _leaky_relu(h)
    h = jnp.dot(h.astype(jnp.bfloat16), w2_ref[...],
                preferred_element_type=jnp.float32) + b2_ref[...]
    h = _leaky_relu(h)
    hb = h.astype(jnp.bfloat16)

    # Two lane-aligned heads instead of one (hidden, 2*out) matmul + lane-offset slice.
    means = jnp.dot(hb, w3m_ref[...], preferred_element_type=jnp.float32) + b3m_ref[...]
    logvars = jnp.dot(hb, w3l_ref[...], preferred_element_type=jnp.float32) + b3l_ref[...]

    max_lv = max_lv_ref[...]
    min_lv = min_lv_ref[...]
    logvars = max_lv - _softplus(max_lv - logvars)
    logvars = min_lv + _softplus(logvars - min_lv)

    means_ref[...] = means
    logvars_ref[...] = logvars


def gaussian_mlp_forward(x, params, out_size, *, block_b=256):
    """Forward pass. x: (B, in_size) f32. Returns (means, logvars), each (B, out_size) f32."""
    B, in_size = x.shape
    in_pad = params["in_mean"].shape[1]

    # Pick a batch tile: multiple of 8 sublanes, up to block_b rows.
    tb = block_b if B >= block_b else _round_up(max(B, 1), SUBLANE)
    b_pad = _round_up(B, tb)

    # Zero-pad x to (b_pad, in_pad). Pad rows/cols stay finite through the whole net.
    x_p = jnp.zeros((b_pad, in_pad), jnp.float32).at[:B, :in_size].set(
        x.astype(jnp.float32))

    row_map = lambda i: (i, 0)
    const_map = lambda i: (0, 0)

    in_specs = [
        pl.BlockSpec((tb, in_pad), row_map),            # x
        pl.BlockSpec((1, in_pad), const_map),           # in_mean
        pl.BlockSpec((1, in_pad), const_map),           # in_inv_std
        pl.BlockSpec((in_pad, HIDDEN), const_map),      # w0
        pl.BlockSpec((1, HIDDEN), const_map),           # b0
        pl.BlockSpec((HIDDEN, HIDDEN), const_map),      # w1
        pl.BlockSpec((1, HIDDEN), const_map),           # b1
        pl.BlockSpec((HIDDEN, HIDDEN), const_map),      # w2
        pl.BlockSpec((1, HIDDEN), const_map),           # b2
        pl.BlockSpec((HIDDEN, OUT_PAD), const_map),     # w3_mean
        pl.BlockSpec((1, OUT_PAD), const_map),          # b3_mean
        pl.BlockSpec((HIDDEN, OUT_PAD), const_map),     # w3_logvar
        pl.BlockSpec((1, OUT_PAD), const_map),          # b3_logvar
        pl.BlockSpec((1, OUT_PAD), const_map),          # min_logvar
        pl.BlockSpec((1, OUT_PAD), const_map),          # max_logvar
    ]
    out_specs = (
        pl.BlockSpec((tb, OUT_PAD), row_map),
        pl.BlockSpec((tb, OUT_PAD), row_map),
    )

    means_p, logvars_p = pl.pallas_call(
        gaussian_mlp_kernel,
        out_shape=(
            jax.ShapeDtypeStruct((b_pad, OUT_PAD), jnp.float32),
            jax.ShapeDtypeStruct((b_pad, OUT_PAD), jnp.float32),
        ),
        grid=(b_pad // tb,),
        in_specs=in_specs,
        out_specs=out_specs,
        compiler_params=pltpu.CompilerParams(
            dimension_semantics=("parallel",)),  # shards batch tiles across TCs on v7x
    )(
        x_p,
        params["in_mean"], params["in_inv_std"],
        params["w0"], params["b0"],
        params["w1"], params["b1"],
        params["w2"], params["b2"],
        params["w3_mean"], params["b3_mean"],
        params["w3_logvar"], params["b3_logvar"],
        params["min_logvar"], params["max_logvar"],
    )
    return means_p[:B, :out_size], logvars_p[:B, :out_size]


def init_params(key, in_size, out_size, hidden_raw=200):
    """Deterministic init matching the torch module's parameter shapes
    (uniform +-1/sqrt(fan_in)), zero-padded to lane-aligned shapes.
    Weights are stored bf16 (MXU operands), biases/stats f32."""
    in_pad = _round_up(in_size, LANE)
    keys = jax.random.split(key, 10)

    def linear(kw, kb, fan_in, fan_out, fan_in_pad, fan_out_pad):
        bound = 1.0 / jnp.sqrt(float(fan_in))
        w = jax.random.uniform(kw, (fan_in, fan_out), jnp.float32, -bound, bound)
        b = jax.random.uniform(kb, (1, fan_out), jnp.float32, -bound, bound)
        w_p = jnp.zeros((fan_in_pad, fan_out_pad), jnp.float32).at[:fan_in, :fan_out].set(w)
        b_p = jnp.zeros((1, fan_out_pad), jnp.float32).at[:, :fan_out].set(b)
        return w_p.astype(jnp.bfloat16), b_p

    w0, b0 = linear(keys[0], keys[1], in_size, hidden_raw, in_pad, HIDDEN)
    w1, b1 = linear(keys[2], keys[3], hidden_raw, hidden_raw, HIDDEN, HIDDEN)
    w2, b2 = linear(keys[4], keys[5], hidden_raw, hidden_raw, HIDDEN, HIDDEN)

    # Final torch Linear(200, 2*out) split into mean / logvar heads, each padded to 128 lanes.
    bound = 1.0 / jnp.sqrt(float(hidden_raw))
    w3 = jax.random.uniform(keys[6], (hidden_raw, 2 * out_size), jnp.float32, -bound, bound)
    b3 = jax.random.uniform(keys[7], (1, 2 * out_size), jnp.float32, -bound, bound)
    w3m = jnp.zeros((HIDDEN, OUT_PAD), jnp.float32).at[:hidden_raw, :out_size].set(
        w3[:, :out_size]).astype(jnp.bfloat16)
    w3l = jnp.zeros((HIDDEN, OUT_PAD), jnp.float32).at[:hidden_raw, :out_size].set(
        w3[:, out_size:]).astype(jnp.bfloat16)
    b3m = jnp.zeros((1, OUT_PAD), jnp.float32).at[:, :out_size].set(b3[:, :out_size])
    b3l = jnp.zeros((1, OUT_PAD), jnp.float32).at[:, :out_size].set(b3[:, out_size:])

    # Input normalizer stats; pad: mean=0, inv_std=1 so padded input lanes stay zero.
    in_mean_raw = jax.random.normal(keys[8], (1, in_size), jnp.float32) * 0.1
    in_std_raw = 1.0 + jnp.abs(jax.random.normal(keys[9], (1, in_size), jnp.float32)) * 0.1
    in_mean = jnp.zeros((1, in_pad), jnp.float32).at[:, :in_size].set(in_mean_raw)
    in_inv_std = jnp.ones((1, in_pad), jnp.float32).at[:, :in_size].set(1.0 / in_std_raw)

    return dict(
        in_mean=in_mean, in_inv_std=in_inv_std,
        w0=w0, b0=b0, w1=w1, b1=b1, w2=w2, b2=b2,
        w3_mean=w3m, b3_mean=b3m, w3_logvar=w3l, b3_logvar=b3l,
        # padded lanes carry the same constants so softplus bounding stays finite there
        min_logvar=jnp.full((1, OUT_PAD), -10.0, jnp.float32),
        max_logvar=jnp.full((1, OUT_PAD), 0.5, jnp.float32),
    )


def reference_forward(x, params, out_size):
    """Pure-JAX reference mirroring the PyTorch forward (same bf16-MXU / f32-accumulate
    precision as the kernel so tolerances stay tight)."""
    B, in_size = x.shape
    in_pad = params["in_mean"].shape[1]
    x_p = jnp.zeros((B, in_pad), jnp.float32).at[:, :in_size].set(x.astype(jnp.float32))

    xn = (x_p - params["in_mean"]) * params["in_inv_std"]
    h = _leaky_relu(jnp.dot(xn.astype(jnp.bfloat16), params["w0"],
                            preferred_element_type=jnp.float32) + params["b0"])
    h = _leaky_relu(jnp.dot(h.astype(jnp.bfloat16), params["w1"],
                            preferred_element_type=jnp.float32) + params["b1"])
    h = _leaky_relu(jnp.dot(h.astype(jnp.bfloat16), params["w2"],
                            preferred_element_type=jnp.float32) + params["b2"])
    hb = h.astype(jnp.bfloat16)
    means = jnp.dot(hb, params["w3_mean"],
                    preferred_element_type=jnp.float32) + params["b3_mean"]
    logvars = jnp.dot(hb, params["w3_logvar"],
                      preferred_element_type=jnp.float32) + params["b3_logvar"]
    logvars = params["max_logvar"] - jax.nn.softplus(params["max_logvar"] - logvars)
    logvars = params["min_logvar"] + jax.nn.softplus(logvars - params["min_logvar"])
    return means[:, :out_size], logvars[:, :out_size]


# TODO(synk): only forward() is implemented; Normalizer stat updates, predict()'s
# sampling/denormalization and the Adam training loop are host-side logic, not kernels.

if __name__ == "__main__":
    state_size, action_size, out_size = 12, 4, 12
    in_size = state_size + action_size
    batch = 8

    key = jax.random.PRNGKey(0)
    k_param, k_x, k_x2 = jax.random.split(key, 3)
    params = init_params(k_param, in_size, out_size)

    # Small-batch check (grid of 1).
    x = jax.random.normal(k_x, (batch, in_size), jnp.float32)
    means, logvars = gaussian_mlp_forward(x, params, out_size)
    jax.block_until_ready((means, logvars))
    ref_means, ref_logvars = reference_forward(x, params, out_size)
    assert means.shape == (batch, out_size)
    assert logvars.shape == (batch, out_size)
    assert jnp.allclose(means, ref_means, atol=2e-3, rtol=2e-3)
    assert jnp.allclose(logvars, ref_logvars, atol=2e-3, rtol=2e-3)

    # Larger, non-tile-multiple batch to exercise the batch grid + padding path.
    batch2 = 260
    x2 = jax.random.normal(k_x2, (batch2, in_size), jnp.float32)
    means2, logvars2 = gaussian_mlp_forward(x2, params, out_size, block_b=256)
    jax.block_until_ready((means2, logvars2))
    ref_means2, ref_logvars2 = reference_forward(x2, params, out_size)
    assert means2.shape == (batch2, out_size)
    assert jnp.allclose(means2, ref_means2, atol=2e-3, rtol=2e-3)
    assert jnp.allclose(logvars2, ref_logvars2, atol=2e-3, rtol=2e-3)

    print("KERNEL_OK")
</pallas_src>

<mosaic_0001>
module attributes {stable_mosaic.version = 11 : i64} {
  func.func @gaussian_mlp_kernel(%arg0: i32, %arg1: memref<8x128xf32, #tpu.memory_space<vmem>>, %arg2: memref<1x128xf32, #tpu.memory_space<vmem>>, %arg3: memref<1x128xf32, #tpu.memory_space<vmem>>, %arg4: memref<128x256xbf16, #tpu.memory_space<vmem>>, %arg5: memref<1x256xf32, #tpu.memory_space<vmem>>, %arg6: memref<256x256xbf16, #tpu.memory_space<vmem>>, %arg7: memref<1x256xf32, #tpu.memory_space<vmem>>, %arg8: memref<256x256xbf16, #tpu.memory_space<vmem>>, %arg9: memref<1x256xf32, #tpu.memory_space<vmem>>, %arg10: memref<256x128xbf16, #tpu.memory_space<vmem>>, %arg11: memref<1x128xf32, #tpu.memory_space<vmem>>, %arg12: memref<256x128xbf16, #tpu.memory_space<vmem>>, %arg13: memref<1x128xf32, #tpu.memory_space<vmem>>, %arg14: memref<1x128xf32, #tpu.memory_space<vmem>>, %arg15: memref<1x128xf32, #tpu.memory_space<vmem>>, %arg16: memref<8x128xf32, #tpu.memory_space<vmem>>, %arg17: memref<8x128xf32, #tpu.memory_space<vmem>>) attributes {dimension_semantics = [#tpu.dimension_semantics<parallel>], iteration_bounds = array<i64: 1>, scalar_prefetch = 0 : i64, scratch_operands = 0 : i64, tpu.core_type = #tpu.core_type<tc>, window_params = [{transform_indices = @transform_0, window_bounds = array<i64: 8, 128>}, {pipeline_mode = #tpu.pipeline_mode<synchronous>, transform_indices = @transform_1, window_bounds = array<i64: 1, 128>}, {pipeline_mode = #tpu.pipeline_mode<synchronous>, transform_indices = @transform_2, window_bounds = array<i64: 1, 128>}, {pipeline_mode = #tpu.pipeline_mode<synchronous>, transform_indices = @transform_3, window_bounds = array<i64: 128, 256>}, {pipeline_mode = #tpu.pipeline_mode<synchronous>, transform_indices = @transform_4, window_bounds = array<i64: 1, 256>}, {pipeline_mode = #tpu.pipeline_mode<synchronous>, transform_indices = @transform_5, window_bounds = array<i64: 256, 256>}, {pipeline_mode = #tpu.pipeline_mode<synchronous>, transform_indices = @transform_6, window_bounds = array<i64: 1, 256>}, {pipeline_mode = #tpu.pipeline_mode<synchronous>, transform_indices = @transform_7, window_bounds = array<i64: 256, 256>}, {pipeline_mode = #tpu.pipeline_mode<synchronous>, transform_indices = @transform_8, window_bounds = array<i64: 1, 256>}, {pipeline_mode = #tpu.pipeline_mode<synchronous>, transform_indices = @transform_9, window_bounds = array<i64: 256, 128>}, {pipeline_mode = #tpu.pipeline_mode<synchronous>, transform_indices = @transform_10, window_bounds = array<i64: 1, 128>}, {pipeline_mode = #tpu.pipeline_mode<synchronous>, transform_indices = @transform_11, window_bounds = array<i64: 256, 128>}, {pipeline_mode = #tpu.pipeline_mode<synchronous>, transform_indices = @transform_12, window_bounds = array<i64: 1, 128>}, {pipeline_mode = #tpu.pipeline_mode<synchronous>, transform_indices = @transform_13, window_bounds = array<i64: 1, 128>}, {pipeline_mode = #tpu.pipeline_mode<synchronous>, transform_indices = @transform_14, window_bounds = array<i64: 1, 128>}, {transform_indices = @transform_15, window_bounds = array<i64: 8, 128>}, {transform_indices = @transform_16, window_bounds = array<i64: 8, 128>}]} {
    %c0 = arith.constant 0 : index
    %c0_0 = arith.constant 0 : index
    %0 = vector.load %arg1[%c0, %c0_0] : memref<8x128xf32, #tpu.memory_space<vmem>>, vector<8x128xf32>
    %c0_1 = arith.constant 0 : index
    %c0_2 = arith.constant 0 : index
    %1 = vector.load %arg2[%c0_1, %c0_2] : memref<1x128xf32, #tpu.memory_space<vmem>>, vector<1x128xf32>
    %2 = vector.broadcast %1 : vector<1x128xf32> to vector<8x128xf32>
    %3 = arith.subf %0, %2 : vector<8x128xf32>
    %c0_3 = arith.constant 0 : index
    %c0_4 = arith.constant 0 : index
    %4 = vector.load %arg3[%c0_3, %c0_4] : memref<1x128xf32, #tpu.memory_space<vmem>>, vector<1x128xf32>
    %5 = vector.broadcast %4 : vector<1x128xf32> to vector<8x128xf32>
    %6 = arith.mulf %3, %5 : vector<8x128xf32>
    %7 = arith.truncf %6 : vector<8x128xf32> to vector<8x128xbf16>
    %c0_5 = arith.constant 0 : index
    %c0_6 = arith.constant 0 : index
    %8 = vector.load %arg4[%c0_5, %c0_6] : memref<128x256xbf16, #tpu.memory_space<vmem>>, vector<128x256xbf16>
    %cst = arith.constant dense<0.000000e+00> : vector<8x256xf32>
    %9 = tpu.matmul %7, %8, %cst {dimension_numbers = #tpu.dot_dimension_numbers<[1], [0], [0], [1], [0, 0, 1, 1], [], []>} : vector<8x128xbf16>, vector<128x256xbf16>, vector<8x256xf32> -> vector<8x256xf32>
    %c0_7 = arith.constant 0 : index
    %c0_8 = arith.constant 0 : index
    %10 = vector.load %arg5[%c0_7, %c0_8] : memref<1x256xf32, #tpu.memory_space<vmem>>, vector<1x256xf32>
    %11 = vector.broadcast %10 : vector<1x256xf32> to vector<8x256xf32>
    %12 = arith.addf %9, %11 : vector<8x256xf32>
    %cst_9 = arith.constant 0.000000e+00 : f32
    %13 = vector.broadcast %cst_9 : f32 to vector<8x256xf32>
    %14 = arith.cmpf oge, %12, %13 : vector<8x256xf32>
    %cst_10 = arith.constant 0.00999999977 : f32
    %15 = vector.broadcast %cst_10 : f32 to vector<8x256xf32>
    %16 = arith.mulf %15, %12 : vector<8x256xf32>
    %17 = arith.select %14, %12, %16 : vector<8x256xi1>, vector<8x256xf32>
    %18 = arith.truncf %17 : vector<8x256xf32> to vector<8x256xbf16>
    %c0_11 = arith.constant 0 : index
    %c0_12 = arith.constant 0 : index
    %19 = vector.load %arg6[%c0_11, %c0_12] : memref<256x256xbf16, #tpu.memory_space<vmem>>, vector<256x256xbf16>
    %cst_13 = arith.constant dense<0.000000e+00> : vector<8x256xf32>
    %20 = tpu.matmul %18, %19, %cst_13 {dimension_numbers = #tpu.dot_dimension_numbers<[1], [0], [0], [1], [0, 0, 1, 1], [], []>} : vector<8x256xbf16>, vector<256x256xbf16>, vector<8x256xf32> -> vector<8x256xf32>
    %c0_14 = arith.constant 0 : index
    %c0_15 = arith.constant 0 : index
    %21 = vector.load %arg7[%c0_14, %c0_15] : memref<1x256xf32, #tpu.memory_space<vmem>>, vector<1x256xf32>
    %22 = vector.broadcast %21 : vector<1x256xf32> to vector<8x256xf32>
    %23 = arith.addf %20, %22 : vector<8x256xf32>
    %cst_16 = arith.constant 0.000000e+00 : f32
    %24 = vector.broadcast %cst_16 : f32 to vector<8x256xf32>
    %25 = arith.cmpf oge, %23, %24 : vector<8x256xf32>
    %cst_17 = arith.constant 0.00999999977 : f32
    %26 = vector.broadcast %cst_17 : f32 to vector<8x256xf32>
    %27 = arith.mulf %26, %23 : vector<8x256xf32>
    %28 = arith.select %25, %23, %27 : vector<8x256xi1>, vector<8x256xf32>
    %29 = arith.truncf %28 : vector<8x256xf32> to vector<8x256xbf16>
    %c0_18 = arith.constant 0 : index
    %c0_19 = arith.constant 0 : index
    %30 = vector.load %arg8[%c0_18, %c0_19] : memref<256x256xbf16, #tpu.memory_space<vmem>>, vector<256x256xbf16>
    %cst_20 = arith.constant dense<0.000000e+00> : vector<8x256xf32>
    %31 = tpu.matmul %29, %30, %cst_20 {dimension_numbers = #tpu.dot_dimension_numbers<[1], [0], [0], [1], [0, 0, 1, 1], [], []>} : vector<8x256xbf16>, vector<256x256xbf16>, vector<8x256xf32> -> vector<8x256xf32>
    %c0_21 = arith.constant 0 : index
    %c0_22 = arith.constant 0 : index
    %32 = vector.load %arg9[%c0_21, %c0_22] : memref<1x256xf32, #tpu.memory_space<vmem>>, vector<1x256xf32>
    %33 = vector.broadcast %32 : vector<1x256xf32> to vector<8x256xf32>
    %34 = arith.addf %31, %33 : vector<8x256xf32>
    %cst_23 = arith.constant 0.000000e+00 : f32
    %35 = vector.broadcast %cst_23 : f32 to vector<8x256xf32>
    %36 = arith.cmpf oge, %34, %35 : vector<8x256xf32>
    %cst_24 = arith.constant 0.00999999977 : f32
    %37 = vector.broadcast %cst_24 : f32 to vector<8x256xf32>
    %38 = arith.mulf %37, %34 : vector<8x256xf32>
    %39 = arith.select %36, %34, %38 : vector<8x256xi1>, vector<8x256xf32>
    %40 = arith.truncf %39 : vector<8x256xf32> to vector<8x256xbf16>
    %c0_25 = arith.constant 0 : index
    %c0_26 = arith.constant 0 : index
    %41 = vector.load %arg10[%c0_25, %c0_26] : memref<256x128xbf16, #tpu.memory_space<vmem>>, vector<256x128xbf16>
    %cst_27 = arith.constant dense<0.000000e+00> : vector<8x128xf32>
    %42 = tpu.matmul %40, %41, %cst_27 {dimension_numbers = #tpu.dot_dimension_numbers<[1], [0], [0], [1], [0, 0, 1, 1], [], []>} : vector<8x256xbf16>, vector<256x128xbf16>, vector<8x128xf32> -> vector<8x128xf32>
    %c0_28 = arith.constant 0 : index
    %c0_29 = arith.constant 0 : index
    %43 = vector.load %arg11[%c0_28, %c0_29] : memref<1x128xf32, #tpu.memory_space<vmem>>, vector<1x128xf32>
    %44 = vector.broadcast %43 : vector<1x128xf32> to vector<8x128xf32>
    %45 = arith.addf %42, %44 : vector<8x128xf32>
    %c0_30 = arith.constant 0 : index
    %c0_31 = arith.constant 0 : index
    %46 = vector.load %arg12[%c0_30, %c0_31] : memref<256x128xbf16, #tpu.memory_space<vmem>>, vector<256x128xbf16>
    %cst_32 = arith.constant dense<0.000000e+00> : vector<8x128xf32>
    %47 = tpu.matmul %40, %46, %cst_32 {dimension_numbers = #tpu.dot_dimension_numbers<[1], [0], [0], [1], [0, 0, 1, 1], [], []>} : vector<8x256xbf16>, vector<256x128xbf16>, vector<8x128xf32> -> vector<8x128xf32>
    %c0_33 = arith.constant 0 : index
    %c0_34 = arith.constant 0 : index
    %48 = vector.load %arg13[%c0_33, %c0_34] : memref<1x128xf32, #tpu.memory_space<vmem>>, vector<1x128xf32>
    %49 = vector.broadcast %48 : vector<1x128xf32> to vector<8x128xf32>
    %50 = arith.addf %47, %49 : vector<8x128xf32>
    %c0_35 = arith.constant 0 : index
    %c0_36 = arith.constant 0 : index
    %51 = vector.load %arg15[%c0_35, %c0_36] : memref<1x128xf32, #tpu.memory_space<vmem>>, vector<1x128xf32>
    %c0_37 = arith.constant 0 : index
    %c0_38 = arith.constant 0 : index
    %52 = vector.load %arg14[%c0_37, %c0_38] : memref<1x128xf32, #tpu.memory_space<vmem>>, vector<1x128xf32>
    %53 = vector.broadcast %51 : vector<1x128xf32> to vector<8x128xf32>
    %54 = arith.subf %53, %50 : vector<8x128xf32>
    %cst_39 = arith.constant 0.000000e+00 : f32
    %55 = vector.broadcast %cst_39 : f32 to vector<8x128xf32>
    %56 = arith.maximumf %54, %55 : vector<8x128xf32>
    %57 = math.absf %54 : vector<8x128xf32>
    %cst_40 = arith.constant 0.000000e+00 : f32
    %58 = vector.broadcast %cst_40 : f32 to vector<8x128xf32>
    %59 = arith.subf %58, %57 : vector<8x128xf32>
    %60 = math.exp %59 : vector<8x128xf32>
    %61 = math.log1p %60 : vector<8x128xf32>
    %62 = arith.addf %56, %61 : vector<8x128xf32>
    %63 = vector.broadcast %51 : vector<1x128xf32> to vector<8x128xf32>
    %64 = arith.subf %63, %62 : vector<8x128xf32>
    %65 = vector.broadcast %52 : vector<1x128xf32> to vector<8x128xf32>
    %66 = arith.subf %64, %65 : vector<8x128xf32>
    %cst_41 = arith.constant 0.000000e+00 : f32
    %67 = vector.broadcast %cst_41 : f32 to vector<8x128xf32>
    %68 = arith.maximumf %66, %67 : vector<8x128xf32>
    %69 = math.absf %66 : vector<8x128xf32>
    %cst_42 = arith.constant 0.000000e+00 : f32
    %70 = vector.broadcast %cst_42 : f32 to vector<8x128xf32>
    %71 = arith.subf %70, %69 : vector<8x128xf32>
    %72 = math.exp %71 : vector<8x128xf32>
    %73 = math.log1p %72 : vector<8x128xf32>
    %74 = arith.addf %68, %73 : vector<8x128xf32>
    %75 = vector.broadcast %52 : vector<1x128xf32> to vector<8x128xf32>
    %76 = arith.addf %75, %74 : vector<8x128xf32>
    %c0_43 = arith.constant 0 : index
    %c0_44 = arith.constant 0 : index
    %77 = vector.load %arg16[%c0_43, %c0_44] : memref<8x128xf32, #tpu.memory_space<vmem>>, vector<8x128xf32>
    tpu.vector_store %arg16[%c0_43, %c0_44], %45 {strides = array<i32>} : memref<8x128xf32, #tpu.memory_space<vmem>>, vector<8x128xf32>,
    %c0_45 = arith.constant 0 : index
    %c0_46 = arith.constant 0 : index
    %78 = vector.load %arg17[%c0_45, %c0_46] : memref<8x128xf32, #tpu.memory_space<vmem>>, vector<8x128xf32>
    tpu.vector_store %arg17[%c0_45, %c0_46], %76 {strides = array<i32>} : memref<8x128xf32, #tpu.memory_space<vmem>>, vector<8x128xf32>,
    return
  }
  func.func @transform_0(%arg0: i32) -> (i32, i32) {
    %c0_i32 = arith.constant 0 : i32
    %c0_i32_0 = arith.constant 0 : i32
    return %arg0, %c0_i32 : i32, i32
  }
  func.func @transform_1(%arg0: i32) -> (i32, i32) {
    %c0_i32 = arith.constant 0 : i32
    %c0_i32_0 = arith.constant 0 : i32
    %c0_i32_1 = arith.constant 0 : i32
    return %c0_i32, %c0_i32_0 : i32, i32
  }
  func.func @transform_2(%arg0: i32) -> (i32, i32) {
    %c0_i32 = arith.constant 0 : i32
    %c0_i32_0 = arith.constant 0 : i32
    %c0_i32_1 = arith.constant 0 : i32
    return %c0_i32, %c0_i32_0 : i32, i32
  }
  func.func @transform_3(%arg0: i32) -> (i32, i32) {
    %c0_i32 = arith.constant 0 : i32
    %c0_i32_0 = arith.constant 0 : i32
    %c0_i32_1 = arith.constant 0 : i32
    return %c0_i32, %c0_i32_0 : i32, i32
  }
  func.func @transform_4(%arg0: i32) -> (i32, i32) {
    %c0_i32 = arith.constant 0 : i32
    %c0_i32_0 = arith.constant 0 : i32
    %c0_i32_1 = arith.constant 0 : i32
    return %c0_i32, %c0_i32_0 : i32, i32
  }
  func.func @transform_5(%arg0: i32) -> (i32, i32) {
    %c0_i32 = arith.constant 0 : i32
    %c0_i32_0 = arith.constant 0 : i32
    %c0_i32_1 = arith.constant 0 : i32
    return %c0_i32, %c0_i32_0 : i32, i32
  }
  func.func @transform_6(%arg0: i32) -> (i32, i32) {
    %c0_i32 = arith.constant 0 : i32
    %c0_i32_0 = arith.constant 0 : i32
    %c0_i32_1 = arith.constant 0 : i32
    return %c0_i32, %c0_i32_0 : i32, i32
  }
  func.func @transform_7(%arg0: i32) -> (i32, i32) {
    %c0_i32 = arith.constant 0 : i32
    %c0_i32_0 = arith.constant 0 : i32
    %c0_i32_1 = arith.constant 0 : i32
    return %c0_i32, %c0_i32_0 : i32, i32
  }
  func.func @transform_8(%arg0: i32) -> (i32, i32) {
    %c0_i32 = arith.constant 0 : i32
    %c0_i32_0 = arith.constant 0 : i32
    %c0_i32_1 = arith.constant 0 : i32
    return %c0_i32, %c0_i32_0 : i32, i32
  }
  func.func @transform_9(%arg0: i32) -> (i32, i32) {
    %c0_i32 = arith.constant 0 : i32
    %c0_i32_0 = arith.constant 0 : i32
    %c0_i32_1 = arith.constant 0 : i32
    return %c0_i32, %c0_i32_0 : i32, i32
  }
  func.func @transform_10(%arg0: i32) -> (i32, i32) {
    %c0_i32 = arith.constant 0 : i32
    %c0_i32_0 = arith.constant 0 : i32
    %c0_i32_1 = arith.constant 0 : i32
    return %c0_i32, %c0_i32_0 : i32, i32
  }
  func.func @transform_11(%arg0: i32) -> (i32, i32) {
    %c0_i32 = arith.constant 0 : i32
    %c0_i32_0 = arith.constant 0 : i32
    %c0_i32_1 = arith.constant 0 : i32
    return %c0_i32, %c0_i32_0 : i32, i32
  }
  func.func @transform_12(%arg0: i32) -> (i32, i32) {
    %c0_i32 = arith.constant 0 : i32
    %c0_i32_0 = arith.constant 0 : i32
    %c0_i32_1 = arith.constant 0 : i32
    return %c0_i32, %c0_i32_0 : i32, i32
  }
  func.func @transform_13(%arg0: i32) -> (i32, i32) {
    %c0_i32 = arith.constant 0 : i32
    %c0_i32_0 = arith.constant 0 : i32
    %c0_i32_1 = arith.constant 0 : i32
    return %c0_i32, %c0_i32_0 : i32, i32
  }
  func.func @transform_14(%arg0: i32) -> (i32, i32) {
    %c0_i32 = arith.constant 0 : i32
    %c0_i32_0 = arith.constant 0 : i32
    %c0_i32_1 = arith.constant 0 : i32
    return %c0_i32, %c0_i32_0 : i32, i32
  }
  func.func @transform_15(%arg0: i32) -> (i32, i32) {
    %c0_i32 = arith.constant 0 : i32
    %c0_i32_0 = arith.constant 0 : i32
    return %arg0, %c0_i32 : i32, i32
  }
  func.func @transform_16(%arg0: i32) -> (i32, i32) {
    %c0_i32 = arith.constant 0 : i32
    %c0_i32_0 = arith.constant 0 : i32
    return %arg0, %c0_i32 : i32, i32
  }
}

</mosaic_0001>

<llo_original>
// kernel: tpu_custom_call.1
$region0: #{tpu_custom_call.1}
  #allocation0 [shape = 'u32[]', space=smem, size = 0x4, offset = 0x4, fixed_abs, tag = 'smem constant byte address 0x4 - core index']
  #allocation1 [shape = 'u32[144,128]{1,0:T(1,128)}', space=vmem, size = 0x12000, scoped, tag = 'internal scratch']
  %s0 = inlined_call_operand.hbm [shape: f32[8,128], index: 0, kind: input, shape index: {}]
  %s1 = inlined_call_operand.vmem [shape: f32[1,128], index: 1, kind: input, shape index: {}]
  %s2 = inlined_call_operand.hbm [shape: f32[1,128], index: 2, kind: input, shape index: {}]
  %s3 = inlined_call_operand.hbm [shape: bf16[128,256], index: 3, kind: input, shape index: {}]
  %s4 = inlined_call_operand.vmem [shape: f32[1,256], index: 4, kind: input, shape index: {}]
  %s5 = inlined_call_operand.hbm [shape: bf16[256,256], index: 5, kind: input, shape index: {}]
  %s6 = inlined_call_operand.vmem [shape: f32[1,256], index: 6, kind: input, shape index: {}]
  %s7 = inlined_call_operand.hbm [shape: bf16[256,256], index: 7, kind: input, shape index: {}]
  %s8 = inlined_call_operand.vmem [shape: f32[1,256], index: 8, kind: input, shape index: {}]
  %s9 = inlined_call_operand.hbm [shape: bf16[256,128], index: 9, kind: input, shape index: {}]
  %s10 = inlined_call_operand.vmem [shape: f32[1,128], index: 10, kind: input, shape index: {}]
  %s11 = inlined_call_operand.hbm [shape: bf16[256,128], index: 11, kind: input, shape index: {}]
  %s12 = inlined_call_operand.vmem [shape: f32[1,128], index: 12, kind: input, shape index: {}]
  %s13 = inlined_call_operand.vmem [shape: f32[1,128], index: 13, kind: input, shape index: {}]
  %s14 = inlined_call_operand.vmem [shape: f32[1,128], index: 14, kind: input, shape index: {}]
  %s15 = inlined_call_operand.hbm [shape: f32[8,128], index: 15, kind: output, shape index: {0}]
  %s16 = inlined_call_operand.hbm [shape: f32[8,128], index: 16, kind: output, shape index: {1}]
  %17 = xla_tuple %s15, %s16
  %s18 = sld [smem:[#allocation0]]
  $region106: #{tpu_custom_call.1} parent=0
    _
  %s20 = ssub.s32 1, %s18
  %s21 = scalar_select 0, %s20, %s18
  $region1: #{tpu_custom_call.1} parent=0
    #allocation2 [shape = 'u8[4096]{0}', space=vmem, size = 0x1000, scoped, tag = 'input window, operand 0, single buffered']
    #allocation3 [shape = 's32[1]{0}', space=sflag, size = 0x4, scoped, tag = 'scoped memory for tpu_custom_call.1']
    #allocation4 [shape = 's32[1]{0}', space=sflag, size = 0x4, scoped, tag = 'scoped memory for tpu_custom_call.1']
    #allocation5 [shape = 'u8[512]{0}', space=vmem, size = 0x400, scoped, tag = 'input window, operand 2, single buffered']
    #allocation6 [shape = 's32[1]{0}', space=sflag, size = 0x4, scoped, tag = 'scoped memory for tpu_custom_call.1']
    #allocation7 [shape = 'u8[65536]{0}', space=vmem, size = 0x10000, scoped, tag = 'input window, operand 3, single buffered']
    #allocation8 [shape = 'u8[131072]{0}', space=vmem, size = 0x20000, scoped, tag = 'input window, operand 5, single buffered']
    #allocation9 [shape = 's32[1]{0}', space=sflag, size = 0x4, scoped, tag = 'scoped memory for tpu_custom_call.1']
    #allocation10 [shape = 'u8[131072]{0}', space=vmem, size = 0x20000, scoped, tag = 'input window, operand 7, single buffered']
    #allocation11 [shape = 'u8[65536]{0}', space=vmem, size = 0x10000, scoped, tag = 'input window, operand 9, single buffered']
    #allocation12 [shape = 's32[1]{0}', space=sflag, size = 0x4, scoped, tag = 'scoped memory for tpu_custom_call.1']
    #allocation13 [shape = 'u8[65536]{0}', space=vmem, size = 0x10000, scoped, tag = 'input window, operand 11, single buffered']
    #allocation14 [shape = 'u8[4096]{0}', space=vmem, size = 0x1000, scoped, tag = 'output window, operand 0, single buffered']
    #allocation15 [shape = 'u8[4096]{0}', space=vmem, size = 0x1000, scoped, tag = 'output window, operand 1, single buffered']
    #allocation16 [shape = 's32[1]{0}', space=sflag, size = 0x4, scoped, tag = 'scoped memory for tpu_custom_call.1']
    %22 = vsyncpa [#allocation3], 0
    %23 = vsyncpa [#allocation6], 0
    %24 = vsyncpa [#allocation9], 0
    %25 = vsyncpa [#allocation12], 0
    %26 = vsyncpa [#allocation4], 0
    %27 = vsyncpa [#allocation16], 0
    // Predicated region
    $region2: #{tpu_custom_call.1} parent=1 // pred_check
      _
    $region3: #{tpu_custom_call.1} parent=1 // pred_check_branch
      %29 = sbr.rel (0) target = $region5
    $region4: #{tpu_custom_call.1} parent=1 // pred_region
      %s31 = ssub.s32 128, 128
      %32 = vsyncadd [#allocation3], %s31
      %s34 = sshll.u32 [#allocation2], 4
      %s35 = int_to_ptr.vmem [resolvable:$true] %s34
      %37 = dma.hbm_to_vmem [thread:$0]  %s0, 128, %s35, [#allocation3]
    $region5: #{tpu_custom_call.1} parent=1 // pred_fallthru
      _
    // Predicated region
    $region6: #{tpu_custom_call.1} parent=1 // pred_check
      _
    $region7: #{tpu_custom_call.1} parent=1 // pred_check_branch
      %39 = sbr.rel (0) target = $region9
    $region8: #{tpu_custom_call.1} parent=1 // pred_region
      _
    $region9: #{tpu_custom_call.1} parent=1 // pred_fallthru
      _
    // Predicated region
    $region10: #{tpu_custom_call.1} parent=1 // pred_check
      _
    $region11: #{tpu_custom_call.1} parent=1 // pred_check_branch
      %41 = sbr.rel (0) target = $region13
    $region12: #{tpu_custom_call.1} parent=1 // pred_region
      %s43 = ssub.s32 16, 16
      %44 = vsyncadd [#allocation6], %s43
      %s46 = sshll.u32 [#allocation5], 4
      %s47 = int_to_ptr.vmem [resolvable:$true] %s46
      %49 = dma.hbm_to_vmem [thread:$0]  %s2, 16, %s47, [#allocation6]
    $region13: #{tpu_custom_call.1} parent=1 // pred_fallthru
      _
    // Predicated region
    $region14: #{tpu_custom_call.1} parent=1 // pred_check
      _
    $region15: #{tpu_custom_call.1} parent=1 // pred_check_branch
      %51 = sbr.rel (0) target = $region17
    $region16: #{tpu_custom_call.1} parent=1 // pred_region
      %s53 = ssub.s32 2048, 2048
      %54 = vsyncadd [#allocation6], %s53
      %s55 = sshll.u32 [#allocation7], 4
      %s56 = int_to_ptr.vmem [resolvable:$true] %s55
      %61 = dma.hbm_to_vmem [thread:$0]  %s3, 2048, %s56, [#allocation6], 128, 128, 8
    $region17: #{tpu_custom_call.1} parent=1 // pred_fallthru
      _
    // Predicated region
    $region18: #{tpu_custom_call.1} parent=1 // pred_check
      _
    $region19: #{tpu_custom_call.1} parent=1 // pred_check_branch
      %63 = sbr.rel (0) target = $region21
    $region20: #{tpu_custom_call.1} parent=1 // pred_region
      _
    $region21: #{tpu_custom_call.1} parent=1 // pred_fallthru
      _
    // Predicated region
    $region22: #{tpu_custom_call.1} parent=1 // pred_check
      _
    $region23: #{tpu_custom_call.1} parent=1 // pred_check_branch
      %65 = sbr.rel (0) target = $region25
    $region24: #{tpu_custom_call.1} parent=1 // pred_region
      %s67 = ssub.s32 4096, 4096
      %68 = vsyncadd [#allocation9], %s67
      %s69 = sshll.u32 [#allocation8], 4
      %s70 = int_to_ptr.vmem [resolvable:$true] %s69
      %75 = dma.hbm_to_vmem [thread:$0]  %s5, 4096, %s70, [#allocation9], 128, 128, 8
    $region25: #{tpu_custom_call.1} parent=1 // pred_fallthru
      _
    // Predicated region
    $region26: #{tpu_custom_call.1} parent=1 // pred_check
      _
    $region27: #{tpu_custom_call.1} parent=1 // pred_check_branch
      %77 = sbr.rel (0) target = $region29
    $region28: #{tpu_custom_call.1} parent=1 // pred_region
      _
    $region29: #{tpu_custom_call.1} parent=1 // pred_fallthru
      _
    // Predicated region
    $region30: #{tpu_custom_call.1} parent=1 // pred_check
      _
    $region31: #{tpu_custom_call.1} parent=1 // pred_check_branch
      %79 = sbr.rel (0) target = $region33
    $region32: #{tpu_custom_call.1} parent=1 // pred_region
      %s81 = ssub.s32 4096, 4096
      %82 = vsyncadd [#allocation9], %s81
      %s83 = sshll.u32 [#allocation10], 4
      %s84 = int_to_ptr.vmem [resolvable:$true] %s83
      %89 = dma.hbm_to_vmem [thread:$0]  %s7, 4096, %s84, [#allocation9], 128, 128, 8
    $region33: #{tpu_custom_call.1} parent=1 // pred_fallthru
      _
    // Predicated region
    $region34: #{tpu_custom_call.1} parent=1 // pred_check
      _
    $region35: #{tpu_custom_call.1} parent=1 // pred_check_branch
      %91 = sbr.rel (0) target = $region37
    $region36: #{tpu_custom_call.1} parent=1 // pred_region
      _
    $region37: #{tpu_custom_call.1} parent=1 // pred_fallthru
      _
    // Predicated region
    $region38: #{tpu_custom_call.1} parent=1 // pred_check
      _
    $region39: #{tpu_custom_call.1} parent=1 // pred_check_branch
      %93 = sbr.rel (0) target = $region41
    $region40: #{tpu_custom_call.1} parent=1 // pred_region
      %s95 = ssub.s32 2048, 2048
      %96 = vsyncadd [#allocation12], %s95
      %s97 = sshll.u32 [#allocation11], 4
      %s98 = int_to_ptr.vmem [resolvable:$true] %s97
      %103 = dma.hbm_to_vmem [thread:$0]  %s9, 2048, %s98, [#allocation12], 64, 64, 4
    $region41: #{tpu_custom_call.1} parent=1 // pred_fallthru
      _
    // Predicated region
    $region42: #{tpu_custom_call.1} parent=1 // pred_check
      _
    $region43: #{tpu_custom_call.1} parent=1 // pred_check_branch
      %105 = sbr.rel (0) target = $region45
    $region44: #{tpu_custom_call.1} parent=1 // pred_region
      _
    $region45: #{tpu_custom_call.1} parent=1 // pred_fallthru
      _
    // Predicated region
    $region46: #{tpu_custom_call.1} parent=1 // pred_check
      _
    $region47: #{tpu_custom_call.1} parent=1 // pred_check_branch
      %107 = sbr.rel (0) target = $region49
    $region48: #{tpu_custom_call.1} parent=1 // pred_region
      %s109 = ssub.s32 2048, 2048
      %110 = vsyncadd [#allocation12], %s109
      %s111 = sshll.u32 [#allocation13], 4
      %s112 = int_to_ptr.vmem [resolvable:$true] %s111
      %117 = dma.hbm_to_vmem [thread:$0]  %s11, 2048, %s112, [#allocation12], 64, 64, 4
    $region49: #{tpu_custom_call.1} parent=1 // pred_fallthru
      _
    // Predicated region
    $region50: #{tpu_custom_call.1} parent=1 // pred_check
      _
    $region51: #{tpu_custom_call.1} parent=1 // pred_check_branch
      %119 = sbr.rel (0) target = $region53
    $region52: #{tpu_custom_call.1} parent=1 // pred_region
      _
    $region53: #{tpu_custom_call.1} parent=1 // pred_fallthru
      _
    // Predicated region
    $region54: #{tpu_custom_call.1} parent=1 // pred_check
      _
    $region55: #{tpu_custom_call.1} parent=1 // pred_check_branch
      %121 = sbr.rel (0) target = $region57
    $region56: #{tpu_custom_call.1} parent=1 // pred_region
      _
    $region57: #{tpu_custom_call.1} parent=1 // pred_fallthru
      _
    // Predicated region
    $region58: #{tpu_custom_call.1} parent=1 // pred_check
      _
    $region59: #{tpu_custom_call.1} parent=1 // pred_check_branch
      %123 = sbr.rel (0) target = $region61
    $region60: #{tpu_custom_call.1} parent=1 // pred_region
      _
    $region61: #{tpu_custom_call.1} parent=1 // pred_fallthru
      _
    // Predicated region
    $region62: #{tpu_custom_call.1} parent=1 // pred_check
      _
    $region63: #{tpu_custom_call.1} parent=1 // pred_check_branch
      %125 = sbr.rel (0) target = $region65
    $region64: #{tpu_custom_call.1} parent=1 // pred_region
      %126 = dma.done [#allocation3], 128
    $region65: #{tpu_custom_call.1} parent=1 // pred_fallthru
      _
    // Predicated region
    $region66: #{tpu_custom_call.1} parent=1 // pred_check
      _
    $region67: #{tpu_custom_call.1} parent=1 // pred_check_branch
      %128 = sbr.rel (0) target = $region69
    $region68: #{tpu_custom_call.1} parent=1 // pred_region
      %129 = dma.done [#allocation6], 16
    $region69: #{tpu_custom_call.1} parent=1 // pred_fallthru
      _
    // Predicated region
    $region70: #{tpu_custom_call.1} parent=1 // pred_check
      _
    $region71: #{tpu_custom_call.1} parent=1 // pred_check_branch
      %131 = sbr.rel (0) target = $region73
    $region72: #{tpu_custom_call.1} parent=1 // pred_region
      %132 = dma.done [#allocation6], 2048
    $region73: #{tpu_custom_call.1} parent=1 // pred_fallthru
      _
    // Predicated region
    $region74: #{tpu_custom_call.1} parent=1 // pred_check
      _
    $region75: #{tpu_custom_call.1} parent=1 // pred_check_branch
      %134 = sbr.rel (0) target = $region77
    $region76: #{tpu_custom_call.1} parent=1 // pred_region
      %135 = dma.done [#allocation9], 4096
    $region77: #{tpu_custom_call.1} parent=1 // pred_fallthru
      _
    // Predicated region
    $region78: #{tpu_custom_call.1} parent=1 // pred_check
      _
    $region79: #{tpu_custom_call.1} parent=1 // pred_check_branch
      %137 = sbr.rel (0) target = $region81
    $region80: #{tpu_custom_call.1} parent=1 // pred_region
      %138 = dma.done [#allocation9], 4096
    $region81: #{tpu_custom_call.1} parent=1 // pred_fallthru
      _
    // Predicated region
    $region82: #{tpu_custom_call.1} parent=1 // pred_check
      _
    $region83: #{tpu_custom_call.1} parent=1 // pred_check_branch
      %140 = sbr.rel (0) target = $region85
    $region84: #{tpu_custom_call.1} parent=1 // pred_region
      %141 = dma.done [#allocation12], 2048
    $region85: #{tpu_custom_call.1} parent=1 // pred_fallthru
      _
    // Predicated region
    $region86: #{tpu_custom_call.1} parent=1 // pred_check
      _
    $region87: #{tpu_custom_call.1} parent=1 // pred_check_branch
      %143 = sbr.rel (0) target = $region89
    $region88: #{tpu_custom_call.1} parent=1 // pred_region
      %144 = dma.done [#allocation12], 2048
    $region89: #{tpu_custom_call.1} parent=1 // pred_fallthru
      _
    %v146 = vld [vmem:[#allocation2] sm:$0xff]
    %v147 = vld [vmem:[%s1] sm:$0x1]
    %v149 = vlaneseq
    %v150 = vshrl.u32 %v149, 7
    %v151 = vsub.s32 0, %v150
    %v152 = vrot.slane %v147, %v151
    %v154 = vsub.f32 %v146, %v152
    %v155 = vld [vmem:[#allocation5] sm:$0x1]
    %v157 = vlaneseq
    %v158 = vshrl.u32 %v157, 7
    %v159 = vsub.s32 0, %v158
    %v160 = vrot.slane %v155, %v159
    %v162 = vmul.f32 %v154, %v160
    %v163 = vpack.c.bf16 %v162, %v162
    %v164 = vld [vmem:[#allocation7] sm:$0xff]
    %v165 = vld [vmem:[#allocation7 + $0x8] sm:$0xff]
    %v166 = vld [vmem:[#allocation7 + $0x10] sm:$0xff]
    %v167 = vld [vmem:[#allocation7 + $0x18] sm:$0xff]
    %v168 = vld [vmem:[#allocation7 + $0x20] sm:$0xff]
    %v169 = vld [vmem:[#allocation7 + $0x28] sm:$0xff]
    %v170 = vld [vmem:[#allocation7 + $0x30] sm:$0xff]
    %v171 = vld [vmem:[#allocation7 + $0x38] sm:$0xff]
    %v172 = vld [vmem:[#allocation7 + $0x40] sm:$0xff]
    %v173 = vld [vmem:[#allocation7 + $0x48] sm:$0xff]
    %v174 = vld [vmem:[#allocation7 + $0x50] sm:$0xff]
    %v175 = vld [vmem:[#allocation7 + $0x58] sm:$0xff]
    %v176 = vld [vmem:[#allocation7 + $0x60] sm:$0xff]
    %v177 = vld [vmem:[#allocation7 + $0x68] sm:$0xff]
    %v178 = vld [vmem:[#allocation7 + $0x70] sm:$0xff]
    %v179 = vld [vmem:[#allocation7 + $0x78] sm:$0xff]
    %v180 = vld [vmem:[%s4] sm:$0x3]
    %v182 = vlaneseq
    %v183 = vshrl.u32 %v182, 7
    %v184 = vsub.s32 0, %v183
    %v185 = vrot.slane %v180, %v184
    %v186 = vlaneseq
    %v187 = vshrl.u32 %v186, 7
    %v188 = vsub.s32 1, %v187
    %v189 = vrot.slane %v180, %v188
    %v208 = vunpack.c.l.b16 %v164
    %v209 = vunpack.c.h.b16 %v164
    %v210 = vunpack.c.l.b16 %v165
    %v211 = vunpack.c.h.b16 %v165
    %v212 = vunpack.c.l.b16 %v166
    %v213 = vunpack.c.h.b16 %v166
    %v214 = vunpack.c.l.b16 %v167
    %v215 = vunpack.c.h.b16 %v167
    %v216 = vunpack.c.l.b16 %v168
    %v217 = vunpack.c.h.b16 %v168
    %v218 = vunpack.c.l.b16 %v169
    %v219 = vunpack.c.h.b16 %v169
    %v220 = vunpack.c.l.b16 %v170
    %v221 = vunpack.c.h.b16 %v170
    %v222 = vunpack.c.l.b16 %v171
    %v223 = vunpack.c.h.b16 %v171
    %v224 = vunpack.c.l.b16 %v172
    %v225 = vunpack.c.h.b16 %v172
    %v226 = vunpack.c.l.b16 %v173
    %v227 = vunpack.c.h.b16 %v173
    %v228 = vunpack.c.l.b16 %v174
    %v229 = vunpack.c.h.b16 %v174
    %v230 = vunpack.c.l.b16 %v175
    %v231 = vunpack.c.h.b16 %v175
    %v232 = vunpack.c.l.b16 %v176
    %v233 = vunpack.c.h.b16 %v176
    %v234 = vunpack.c.l.b16 %v177
    %v235 = vunpack.c.h.b16 %v177
    %v236 = vunpack.c.l.b16 %v178
    %v237 = vunpack.c.h.b16 %v178
    %v238 = vunpack.c.l.b16 %v179
    %v239 = vunpack.c.h.b16 %v179
    %v240 = vpack.c.b16 %v210, %v208
    %v241 = vpack.c.b16 %v211, %v209
    %v242 = vpack.c.b16 %v214, %v212
    %v243 = vpack.c.b16 %v215, %v213
    %v244 = vpack.c.b16 %v218, %v216
    %v245 = vpack.c.b16 %v219, %v217
    %v246 = vpack.c.b16 %v222, %v220
    %v247 = vpack.c.b16 %v223, %v221
    %v248 = vpack.c.b16 %v226, %v224
    %v249 = vpack.c.b16 %v227, %v225
    %v250 = vpack.c.b16 %v230, %v228
    %v251 = vpack.c.b16 %v231, %v229
    %v252 = vpack.c.b16 %v234, %v232
    %v253 = vpack.c.b16 %v235, %v233
    %v254 = vpack.c.b16 %v238, %v236
    %v255 = vpack.c.b16 %v239, %v237
    %272 = vmatprep.subr.bf16.mxu0 %v255
    %273 = vmatpush1.bf16.msra.mxu0 %v254
    %274 = vmatprep.subr.bf16.mxu0 %v253
    %275 = vmatpush1.bf16.msra.mxu0 %v252
    %276 = vmatprep.subr.bf16.mxu0 %v251
    %277 = vmatpush1.bf16.msra.mxu0 %v250
    %278 = vmatprep.subr.bf16.mxu0 %v249
    %279 = vmatpush1.bf16.msra.mxu0 %v248
    %280 = vmatprep.subr.bf16.mxu0 %v247
    %281 = vmatpush1.bf16.msra.mxu0 %v246
    %282 = vmatprep.subr.bf16.mxu0 %v245
    %283 = vmatpush1.bf16.msra.mxu0 %v244
    %284 = vmatprep.subr.bf16.mxu0 %v243
    %285 = vmatpush1.bf16.msra.mxu0 %v242
    %286 = vmatprep.subr.bf16.mxu0 %v241
    %287 = vmatpush1.bf16.msra.mxu0 %v240
    %288 = vmatprep.subr.bf16.mxu0 0
    %289 = vmatpush2.bf16.msra.mxu0 0
    %290 = vmatprep.subr.bf16.mxu0 0
    %291 = vmatpush2.bf16.msra.mxu0 0
    %292 = vmatprep.subr.bf16.mxu0 0
    %293 = vmatpush2.bf16.msra.mxu0 0
    %294 = vmatprep.subr.bf16.mxu0 0
    %295 = vmatpush2.bf16.msra.mxu0 0
    %296 = vmatprep.subr.bf16.mxu0 0
    %297 = vmatpush2.bf16.msra.mxu0 0
    %298 = vmatprep.subr.bf16.mxu0 0
    %299 = vmatpush2.bf16.msra.mxu0 0
    %300 = vmatprep.subr.bf16.mxu0 0
    %301 = vmatpush2.bf16.msra.mxu0 0
    %302 = vmatprep.subr.bf16.mxu0 0
    %303 = vmatpush2.bf16.msra.mxu0 0
    %304 = vmatprep.mubr.bf16.mxu0 0
    %305 = vmatmul.mubr.bf16.gmra.mxu0 %v163
    %v306 = vpop.f32.mrf.mxu0
    %v307 = vadd.f32 %v185, %v306
    %v308 = vpop.f32.mrf.mxu0
    %v309 = vadd.f32 %v189, %v308
    %v310 = vpop.f32.mrf.mxu0
    %v311 = vpop.f32.mrf.mxu0
    %312 = vdwg.mxu0
    %vm313 = vcmp.ge.f32.partialorder %v307, 0.0
    %vm314 = vcmp.ge.f32.partialorder %v309, 0.0
    %v315 = vmul.f32 %v307, 0.01
    %v316 = vmul.f32 %v309, 0.01
    %v317 = vsel %vm313, %v307, %v315
    %v318 = vsel %vm314, %v309, %v316
    %v319 = vpack.c.bf16 %v317, %v317
    %v320 = vpack.c.bf16 %v318, %v318
    %v321 = vld [vmem:[#allocation8] sm:$0xff]
    %v322 = vld [vmem:[#allocation8 + $0x8] sm:$0xff]
    %v323 = vld [vmem:[#allocation8 + $0x10] sm:$0xff]
    %v324 = vld [vmem:[#allocation8 + $0x18] sm:$0xff]
    %v325 = vld [vmem:[#allocation8 + $0x20] sm:$0xff]
    %v326 = vld [vmem:[#allocation8 + $0x28] sm:$0xff]
    %v327 = vld [vmem:[#allocation8 + $0x30] sm:$0xff]
    %v328 = vld [vmem:[#allocation8 + $0x38] sm:$0xff]
    %v329 = vld [vmem:[#allocation8 + $0x40] sm:$0xff]
    %v330 = vld [vmem:[#allocation8 + $0x48] sm:$0xff]
    %v331 = vld [vmem:[#allocation8 + $0x50] sm:$0xff]
    %v332 = vld [vmem:[#allocation8 + $0x58] sm:$0xff]
    %v333 = vld [vmem:[#allocation8 + $0x60] sm:$0xff]
    %v334 = vld [vmem:[#allocation8 + $0x68] sm:$0xff]
    %v335 = vld [vmem:[#allocation8 + $0x70] sm:$0xff]
    %v336 = vld [vmem:[#allocation8 + $0x78] sm:$0xff]
    %v337 = vld [vmem:[#allocation8 + $0x80] sm:$0xff]
    %v338 = vld [vmem:[#allocation8 + $0x88] sm:$0xff]
    %v339 = vld [vmem:[#allocation8 + $0x90] sm:$0xff]
    %v340 = vld [vmem:[#allocation8 + $0x98] sm:$0xff]
    %v341 = vld [vmem:[#allocation8 + $0xa0] sm:$0xff]
    %v342 = vld [vmem:[#allocation8 + $0xa8] sm:$0xff]
    %v343 = vld [vmem:[#allocation8 + $0xb0] sm:$0xff]
    %v344 = vld [vmem:[#allocation8 + $0xb8] sm:$0xff]
    %v345 = vld [vmem:[#allocation8 + $0xc0] sm:$0xff]
    %v346 = vld [vmem:[#allocation8 + $0xc8] sm:$0xff]
    %v347 = vld [vmem:[#allocation8 + $0xd0] sm:$0xff]
    %v348 = vld [vmem:[#allocation8 + $0xd8] sm:$0xff]
    %v349 = vld [vmem:[#allocation8 + $0xe0] sm:$0xff]
    %v350 = vld [vmem:[#allocation8 + $0xe8] sm:$0xff]
    %v351 = vld [vmem:[#allocation8 + $0xf0] sm:$0xff]
    %v352 = vld [vmem:[#allocation8 + $0xf8] sm:$0xff]
    %v353 = vld [vmem:[%s6] sm:$0x3]
    %v355 = vlaneseq
    %v356 = vshrl.u32 %v355, 7
    %v357 = vsub.s32 0, %v356
    %v358 = vrot.slane %v353, %v357
    %v359 = vlaneseq
    %v360 = vshrl.u32 %v359, 7
    %v361 = vsub.s32 1, %v360
    %v362 = vrot.slane %v353, %v361
    %v397 = vunpack.c.l.b16 %v321
    %v398 = vunpack.c.h.b16 %v321
    %v399 = vunpack.c.l.b16 %v322
    %v400 = vunpack.c.h.b16 %v322
    %v401 = vunpack.c.l.b16 %v323
    %v402 = vunpack.c.h.b16 %v323
    %v403 = vunpack.c.l.b16 %v324
    %v404 = vunpack.c.h.b16 %v324
    %v405 = vunpack.c.l.b16 %v325
    %v406 = vunpack.c.h.b16 %v325
    %v407 = vunpack.c.l.b16 %v326
    %v408 = vunpack.c.h.b16 %v326
    %v409 = vunpack.c.l.b16 %v327
    %v410 = vunpack.c.h.b16 %v327
    %v411 = vunpack.c.l.b16 %v328
    %v412 = vunpack.c.h.b16 %v328
    %v413 = vunpack.c.l.b16 %v329
    %v414 = vunpack.c.h.b16 %v329
    %v415 = vunpack.c.l.b16 %v330
    %v416 = vunpack.c.h.b16 %v330
    %v417 = vunpack.c.l.b16 %v331
    %v418 = vunpack.c.h.b16 %v331
    %v419 = vunpack.c.l.b16 %v332
    %v420 = vunpack.c.h.b16 %v332
    %v421 = vunpack.c.l.b16 %v333
    %v422 = vunpack.c.h.b16 %v333
    %v423 = vunpack.c.l.b16 %v334
    %v424 = vunpack.c.h.b16 %v334
    %v425 = vunpack.c.l.b16 %v335
    %v426 = vunpack.c.h.b16 %v335
    %v427 = vunpack.c.l.b16 %v336
    %v428 = vunpack.c.h.b16 %v336
    %v429 = vunpack.c.l.b16 %v337
    %v430 = vunpack.c.h.b16 %v337
    %v431 = vunpack.c.l.b16 %v338
    %v432 = vunpack.c.h.b16 %v338
    %v433 = vunpack.c.l.b16 %v339
    %v434 = vunpack.c.h.b16 %v339
    %v435 = vunpack.c.l.b16 %v340
    %v436 = vunpack.c.h.b16 %v340
    %v437 = vunpack.c.l.b16 %v341
    %v438 = vunpack.c.h.b16 %v341
    %v439 = vunpack.c.l.b16 %v342
    %v440 = vunpack.c.h.b16 %v342
    %v441 = vunpack.c.l.b16 %v343
    %v442 = vunpack.c.h.b16 %v343
    %v443 = vunpack.c.l.b16 %v344
    %v444 = vunpack.c.h.b16 %v344
    %v445 = vunpack.c.l.b16 %v345
    %v446 = vunpack.c.h.b16 %v345
    %v447 = vunpack.c.l.b16 %v346
    %v448 = vunpack.c.h.b16 %v346
    %v449 = vunpack.c.l.b16 %v347
    %v450 = vunpack.c.h.b16 %v347
    %v451 = vunpack.c.l.b16 %v348
    %v452 = vunpack.c.h.b16 %v348
    %v453 = vunpack.c.l.b16 %v349
    %v454 = vunpack.c.h.b16 %v349
    %v455 = vunpack.c.l.b16 %v350
    %v456 = vunpack.c.h.b16 %v350
    %v457 = vunpack.c.l.b16 %v351
    %v458 = vunpack.c.h.b16 %v351
    %v459 = vunpack.c.l.b16 %v352
    %v460 = vunpack.c.h.b16 %v352
    %v461 = vpack.c.b16 %v399, %v397
    %v462 = vpack.c.b16 %v400, %v398
    %v463 = vpack.c.b16 %v403, %v401
    %v464 = vpack.c.b16 %v404, %v402
    %v465 = vpack.c.b16 %v407, %v405
    %v466 = vpack.c.b16 %v408, %v406
    %v467 = vpack.c.b16 %v411, %v409
    %v468 = vpack.c.b16 %v412, %v410
    %v469 = vpack.c.b16 %v415, %v413
    %v470 = vpack.c.b16 %v416, %v414
    %v471 = vpack.c.b16 %v419, %v417
    %v472 = vpack.c.b16 %v420, %v418
    %v473 = vpack.c.b16 %v423, %v421
    %v474 = vpack.c.b16 %v424, %v422
    %v475 = vpack.c.b16 %v427, %v425
    %v476 = vpack.c.b16 %v428, %v426
    %v477 = vpack.c.b16 %v431, %v429
    %v478 = vpack.c.b16 %v432, %v430
    %v479 = vpack.c.b16 %v435, %v433
    %v480 = vpack.c.b16 %v436, %v434
    %v481 = vpack.c.b16 %v439, %v437
    %v482 = vpack.c.b16 %v440, %v438
    %v483 = vpack.c.b16 %v443, %v441
    %v484 = vpack.c.b16 %v444, %v442
    %v485 = vpack.c.b16 %v447, %v445
    %v486 = vpack.c.b16 %v448, %v446
    %v487 = vpack.c.b16 %v451, %v449
    %v488 = vpack.c.b16 %v452, %v450
    %v489 = vpack.c.b16 %v455, %v453
    %v490 = vpack.c.b16 %v456, %v454
    %v491 = vpack.c.b16 %v459, %v457
    %v492 = vpack.c.b16 %v460, %v458
    %525 = vmatprep.subr.bf16.mxu0 %v476
    %526 = vmatpush1.bf16.msra.mxu0 %v475
    %527 = vmatprep.subr.bf16.mxu0 %v474
    %528 = vmatpush1.bf16.msra.mxu0 %v473
    %529 = vmatprep.subr.bf16.mxu0 %v472
    %530 = vmatpush1.bf16.msra.mxu0 %v471
    %531 = vmatprep.subr.bf16.mxu0 %v470
    %532 = vmatpush1.bf16.msra.mxu0 %v469
    %533 = vmatprep.subr.bf16.mxu0 %v468
    %534 = vmatpush1.bf16.msra.mxu0 %v467
    %535 = vmatprep.subr.bf16.mxu0 %v466
    %536 = vmatpush1.bf16.msra.mxu0 %v465
    %537 = vmatprep.subr.bf16.mxu0 %v464
    %538 = vmatpush1.bf16.msra.mxu0 %v463
    %539 = vmatprep.subr.bf16.mxu0 %v462
    %540 = vmatpush1.bf16.msra.mxu0 %v461
    %541 = vmatprep.subr.bf16.mxu0 %v492
    %542 = vmatpush2.bf16.msra.mxu0 %v491
    %543 = vmatprep.subr.bf16.mxu0 %v490
    %544 = vmatpush2.bf16.msra.mxu0 %v489
    %545 = vmatprep.subr.bf16.mxu0 %v488
    %546 = vmatpush2.bf16.msra.mxu0 %v487
    %547 = vmatprep.subr.bf16.mxu0 %v486
    %548 = vmatpush2.bf16.msra.mxu0 %v485
    %549 = vmatprep.subr.bf16.mxu0 %v484
    %550 = vmatpush2.bf16.msra.mxu0 %v483
    %551 = vmatprep.subr.bf16.mxu0 %v482
    %552 = vmatpush2.bf16.msra.mxu0 %v481
    %553 = vmatprep.subr.bf16.mxu0 %v480
    %554 = vmatpush2.bf16.msra.mxu0 %v479
    %555 = vmatprep.subr.bf16.mxu0 %v478
    %556 = vmatpush2.bf16.msra.mxu0 %v477
    %557 = vmatprep.mubr.bf16.mxu0 %v320
    %558 = vmatmul.mubr.bf16.gmra.mxu0 %v319
    %v559 = vpop.f32.mrf.mxu0
    %v560 = vadd.f32 %v358, %v559
    %v561 = vpop.f32.mrf.mxu0
    %v562 = vadd.f32 %v362, %v561
    %v563 = vpop.f32.mrf.mxu0
    %v564 = vpop.f32.mrf.mxu0
    %565 = vdwg.mxu0
    %vm566 = vcmp.ge.f32.partialorder %v560, 0.0
    %vm567 = vcmp.ge.f32.partialorder %v562, 0.0
    %v568 = vmul.f32 %v560, 0.01
    %v569 = vmul.f32 %v562, 0.01
    %v570 = vsel %vm566, %v560, %v568
    %v571 = vsel %vm567, %v562, %v569
    %v572 = vpack.c.bf16 %v570, %v570
    %v573 = vpack.c.bf16 %v571, %v571
    %v574 = vld [vmem:[#allocation10] sm:$0xff]
    %v575 = vld [vmem:[#allocation10 + $0x8] sm:$0xff]
    %v576 = vld [vmem:[#allocation10 + $0x10] sm:$0xff]
    %v577 = vld [vmem:[#allocation10 + $0x18] sm:$0xff]
    %v578 = vld [vmem:[#allocation10 + $0x20] sm:$0xff]
    %v579 = vld [vmem:[#allocation10 + $0x28] sm:$0xff]
    %v580 = vld [vmem:[#allocation10 + $0x30] sm:$0xff]
    %v581 = vld [vmem:[#allocation10 + $0x38] sm:$0xff]
    %v582 = vld [vmem:[#allocation10 + $0x40] sm:$0xff]
    %v583 = vld [vmem:[#allocation10 + $0x48] sm:$0xff]
    %v584 = vld [vmem:[#allocation10 + $0x50] sm:$0xff]
    %v585 = vld [vmem:[#allocation10 + $0x58] sm:$0xff]
    %v586 = vld [vmem:[#allocation10 + $0x60] sm:$0xff]
    %v587 = vld [vmem:[#allocation10 + $0x68] sm:$0xff]
    %v588 = vld [vmem:[#allocation10 + $0x70] sm:$0xff]
    %v589 = vld [vmem:[#allocation10 + $0x78] sm:$0xff]
    %v590 = vld [vmem:[#allocation10 + $0x80] sm:$0xff]
    %v591 = vld [vmem:[#allocation10 + $0x88] sm:$0xff]
    %v592 = vld [vmem:[#allocation10 + $0x90] sm:$0xff]
    %v593 = vld [vmem:[#allocation10 + $0x98] sm:$0xff]
    %v594 = vld [vmem:[#allocation10 + $0xa0] sm:$0xff]
    %v595 = vld [vmem:[#allocation10 + $0xa8] sm:$0xff]
    %v596 = vld [vmem:[#allocation10 + $0xb0] sm:$0xff]
    %v597 = vld [vmem:[#allocation10 + $0xb8] sm:$0xff]
    %v598 = vld [vmem:[#allocation10 + $0xc0] sm:$0xff]
    %v599 = vld [vmem:[#allocation10 + $0xc8] sm:$0xff]
    %v600 = vld [vmem:[#allocation10 + $0xd0] sm:$0xff]
    %v601 = vld [vmem:[#allocation10 + $0xd8] sm:$0xff]
    %v602 = vld [vmem:[#allocation10 + $0xe0] sm:$0xff]
    %v603 = vld [vmem:[#allocation10 + $0xe8] sm:$0xff]
    %v604 = vld [vmem:[#allocation10 + $0xf0] sm:$0xff]
    %v605 = vld [vmem:[#allocation10 + $0xf8] sm:$0xff]
    %v606 = vld [vmem:[%s8] sm:$0x3]
    %v608 = vlaneseq
    %v609 = vshrl.u32 %v608, 7
    %v610 = vsub.s32 0, %v609
    %v611 = vrot.slane %v606, %v610
    %v612 = vlaneseq
    %v613 = vshrl.u32 %v612, 7
    %v614 = vsub.s32 1, %v613
    %v615 = vrot.slane %v606, %v614
    %v650 = vunpack.c.l.b16 %v574
    %v651 = vunpack.c.h.b16 %v574
    %v652 = vunpack.c.l.b16 %v575
    %v653 = vunpack.c.h.b16 %v575
    %v654 = vunpack.c.l.b16 %v576
    %v655 = vunpack.c.h.b16 %v576
    %v656 = vunpack.c.l.b16 %v577
    %v657 = vunpack.c.h.b16 %v577
    %v658 = vunpack.c.l.b16 %v578
    %v659 = vunpack.c.h.b16 %v578
    %v660 = vunpack.c.l.b16 %v579
    %v661 = vunpack.c.h.b16 %v579
    %v662 = vunpack.c.l.b16 %v580
    %v663 = vunpack.c.h.b16 %v580
    %v664 = vunpack.c.l.b16 %v581
    %v665 = vunpack.c.h.b16 %v581
    %v666 = vunpack.c.l.b16 %v582
    %v667 = vunpack.c.h.b16 %v582
    %v668 = vunpack.c.l.b16 %v583
    %v669 = vunpack.c.h.b16 %v583
    %v670 = vunpack.c.l.b16 %v584
    %v671 = vunpack.c.h.b16 %v584
    %v672 = vunpack.c.l.b16 %v585
    %v673 = vunpack.c.h.b16 %v585
    %v674 = vunpack.c.l.b16 %v586
    %v675 = vunpack.c.h.b16 %v586
    %v676 = vunpack.c.l.b16 %v587
    %v677 = vunpack.c.h.b16 %v587
    %v678 = vunpack.c.l.b16 %v588
    %v679 = vunpack.c.h.b16 %v588
    %v680 = vunpack.c.l.b16 %v589
    %v681 = vunpack.c.h.b16 %v589
    %v682 = vunpack.c.l.b16 %v590
    %v683 = vunpack.c.h.b16 %v590
    %v684 = vunpack.c.l.b16 %v591
    %v685 = vunpack.c.h.b16 %v591
    %v686 = vunpack.c.l.b16 %v592
    %v687 = vunpack.c.h.b16 %v592
    %v688 = vunpack.c.l.b16 %v593
    %v689 = vunpack.c.h.b16 %v593
    %v690 = vunpack.c.l.b16 %v594
    %v691 = vunpack.c.h.b16 %v594
    %v692 = vunpack.c.l.b16 %v595
    %v693 = vunpack.c.h.b16 %v595
    %v694 = vunpack.c.l.b16 %v596
    %v695 = vunpack.c.h.b16 %v596
    %v696 = vunpack.c.l.b16 %v597
    %v697 = vunpack.c.h.b16 %v597
    %v698 = vunpack.c.l.b16 %v598
    %v699 = vunpack.c.h.b16 %v598
    %v700 = vunpack.c.l.b16 %v599
    %v701 = vunpack.c.h.b16 %v599
    %v702 = vunpack.c.l.b16 %v600
    %v703 = vunpack.c.h.b16 %v600
    %v704 = vunpack.c.l.b16 %v601
    %v705 = vunpack.c.h.b16 %v601
    %v706 = vunpack.c.l.b16 %v602
    %v707 = vunpack.c.h.b16 %v602
    %v708 = vunpack.c.l.b16 %v603
    %v709 = vunpack.c.h.b16 %v603
    %v710 = vunpack.c.l.b16 %v604
    %v711 = vunpack.c.h.b16 %v604
    %v712 = vunpack.c.l.b16 %v605
    %v713 = vunpack.c.h.b16 %v605
    %v714 = vpack.c.b16 %v652, %v650
    %v715 = vpack.c.b16 %v653, %v651
    %v716 = vpack.c.b16 %v656, %v654
    %v717 = vpack.c.b16 %v657, %v655
    %v718 = vpack.c.b16 %v660, %v658
    %v719 = vpack.c.b16 %v661, %v659
    %v720 = vpack.c.b16 %v664, %v662
    %v721 = vpack.c.b16 %v665, %v663
    %v722 = vpack.c.b16 %v668, %v666
    %v723 = vpack.c.b16 %v669, %v667
    %v724 = vpack.c.b16 %v672, %v670
    %v725 = vpack.c.b16 %v673, %v671
    %v726 = vpack.c.b16 %v676, %v674
    %v727 = vpack.c.b16 %v677, %v675
    %v728 = vpack.c.b16 %v680, %v678
    %v729 = vpack.c.b16 %v681, %v679
    %v730 = vpack.c.b16 %v684, %v682
    %v731 = vpack.c.b16 %v685, %v683
    %v732 = vpack.c.b16 %v688, %v686
    %v733 = vpack.c.b16 %v689, %v687
    %v734 = vpack.c.b16 %v692, %v690
    %v735 = vpack.c.b16 %v693, %v691
    %v736 = vpack.c.b16 %v696, %v694
    %v737 = vpack.c.b16 %v697, %v695
    %v738 = vpack.c.b16 %v700, %v698
    %v739 = vpack.c.b16 %v701, %v699
    %v740 = vpack.c.b16 %v704, %v702
    %v741 = vpack.c.b16 %v705, %v703
    %v742 = vpack.c.b16 %v708, %v706
    %v743 = vpack.c.b16 %v709, %v707
    %v744 = vpack.c.b16 %v712, %v710
    %v745 = vpack.c.b16 %v713, %v711
    %778 = vmatprep.subr.bf16.mxu0 %v729
    %779 = vmatpush1.bf16.msra.mxu0 %v728
    %780 = vmatprep.subr.bf16.mxu0 %v727
    %781 = vmatpush1.bf16.msra.mxu0 %v726
    %782 = vmatprep.subr.bf16.mxu0 %v725
    %783 = vmatpush1.bf16.msra.mxu0 %v724
    %784 = vmatprep.subr.bf16.mxu0 %v723
    %785 = vmatpush1.bf16.msra.mxu0 %v722
    %786 = vmatprep.subr.bf16.mxu0 %v721
    %787 = vmatpush1.bf16.msra.mxu0 %v720
    %788 = vmatprep.subr.bf16.mxu0 %v719
    %789 = vmatpush1.bf16.msra.mxu0 %v718
    %790 = vmatprep.subr.bf16.mxu0 %v717
    %791 = vmatpush1.bf16.msra.mxu0 %v716
    %792 = vmatprep.subr.bf16.mxu0 %v715
    %793 = vmatpush1.bf16.msra.mxu0 %v714
    %794 = vmatprep.subr.bf16.mxu0 %v745
    %795 = vmatpush2.bf16.msra.mxu0 %v744
    %796 = vmatprep.subr.bf16.mxu0 %v743
    %797 = vmatpush2.bf16.msra.mxu0 %v742
    %798 = vmatprep.subr.bf16.mxu0 %v741
    %799 = vmatpush2.bf16.msra.mxu0 %v740
    %800 = vmatprep.subr.bf16.mxu0 %v739
    %801 = vmatpush2.bf16.msra.mxu0 %v738
    %802 = vmatprep.subr.bf16.mxu0 %v737
    %803 = vmatpush2.bf16.msra.mxu0 %v736
    %804 = vmatprep.subr.bf16.mxu0 %v735
    %805 = vmatpush2.bf16.msra.mxu0 %v734
    %806 = vmatprep.subr.bf16.mxu0 %v733
    %807 = vmatpush2.bf16.msra.mxu0 %v732
    %808 = vmatprep.subr.bf16.mxu0 %v731
    %809 = vmatpush2.bf16.msra.mxu0 %v730
    %810 = vmatprep.mubr.bf16.mxu0 %v573
    %811 = vmatmul.mubr.bf16.gmra.mxu0 %v572
    %v812 = vpop.f32.mrf.mxu0
    %v813 = vadd.f32 %v611, %v812
    %v814 = vpop.f32.mrf.mxu0
    %v815 = vadd.f32 %v615, %v814
    %v816 = vpop.f32.mrf.mxu0
    %v817 = vpop.f32.mrf.mxu0
    %818 = vdwg.mxu0
    %vm819 = vcmp.ge.f32.partialorder %v813, 0.0
    %vm820 = vcmp.ge.f32.partialorder %v815, 0.0
    %v821 = vmul.f32 %v813, 0.01
    %v822 = vmul.f32 %v815, 0.01
    %v823 = vsel %vm819, %v813, %v821
    %v824 = vsel %vm820, %v815, %v822
    %v825 = vpack.c.bf16 %v823, %v823
    %v826 = vpack.c.bf16 %v824, %v824
    %v827 = vld [vmem:[#allocation11] sm:$0xf]
    %v828 = vld [vmem:[#allocation11 + $0x4] sm:$0xf]
    %v829 = vld [vmem:[#allocation11 + $0x8] sm:$0xf]
    %v830 = vld [vmem:[#allocation11 + $0xc] sm:$0xf]
    %v831 = vld [vmem:[#allocation11 + $0x10] sm:$0xf]
    %v832 = vld [vmem:[#allocation11 + $0x14] sm:$0xf]
    %v833 = vld [vmem:[#allocation11 + $0x18] sm:$0xf]
    %v834 = vld [vmem:[#allocation11 + $0x1c] sm:$0xf]
    %v835 = vld [vmem:[#allocation11 + $0x20] sm:$0xf]
    %v836 = vld [vmem:[#allocation11 + $0x24] sm:$0xf]
    %v837 = vld [vmem:[#allocation11 + $0x28] sm:$0xf]
    %v838 = vld [vmem:[#allocation11 + $0x2c] sm:$0xf]
    %v839 = vld [vmem:[#allocation11 + $0x30] sm:$0xf]
    %v840 = vld [vmem:[#allocation11 + $0x34] sm:$0xf]
    %v841 = vld [vmem:[#allocation11 + $0x38] sm:$0xf]
    %v842 = vld [vmem:[#allocation11 + $0x3c] sm:$0xf]
    %v843 = vld [vmem:[#allocation11 + $0x40] sm:$0xf]
    %v844 = vld [vmem:[#allocation11 + $0x44] sm:$0xf]
    %v845 = vld [vmem:[#allocation11 + $0x48] sm:$0xf]
    %v846 = vld [vmem:[#allocation11 + $0x4c] sm:$0xf]
    %v847 = vld [vmem:[#allocation11 + $0x50] sm:$0xf]
    %v848 = vld [vmem:[#allocation11 + $0x54] sm:$0xf]
    %v849 = vld [vmem:[#allocation11 + $0x58] sm:$0xf]
    %v850 = vld [vmem:[#allocation11 + $0x5c] sm:$0xf]
    %v851 = vld [vmem:[#allocation11 + $0x60] sm:$0xf]
    %v852 = vld [vmem:[#allocation11 + $0x64] sm:$0xf]
    %v853 = vld [vmem:[#allocation11 + $0x68] sm:$0xf]
    %v854 = vld [vmem:[#allocation11 + $0x6c] sm:$0xf]
    %v855 = vld [vmem:[#allocation11 + $0x70] sm:$0xf]
    %v856 = vld [vmem:[#allocation11 + $0x74] sm:$0xf]
    %v857 = vld [vmem:[#allocation11 + $0x78] sm:$0xf]
    %v858 = vld [vmem:[#allocation11 + $0x7c] sm:$0xf]
    %v859 = vld [vmem:[%s10] sm:$0x1]
    %v861 = vlaneseq
    %v862 = vshrl.u32 %v861, 7
    %v863 = vsub.s32 0, %v862
    %v864 = vrot.slane %v859, %v863
    %v898 = vunpack.c.l.b16 %v827
    %v899 = vunpack.c.l.b16 %v828
    %v900 = vunpack.c.l.b16 %v829
    %v901 = vunpack.c.l.b16 %v830
    %v902 = vunpack.c.l.b16 %v831
    %v903 = vunpack.c.l.b16 %v832
    %v904 = vunpack.c.l.b16 %v833
    %v905 = vunpack.c.l.b16 %v834
    %v906 = vunpack.c.l.b16 %v835
    %v907 = vunpack.c.l.b16 %v836
    %v908 = vunpack.c.l.b16 %v837
    %v909 = vunpack.c.l.b16 %v838
    %v910 = vunpack.c.l.b16 %v839
    %v911 = vunpack.c.l.b16 %v840
    %v912 = vunpack.c.l.b16 %v841
    %v913 = vunpack.c.l.b16 %v842
    %v914 = vunpack.c.l.b16 %v843
    %v915 = vunpack.c.l.b16 %v844
    %v916 = vunpack.c.l.b16 %v845
    %v917 = vunpack.c.l.b16 %v846
    %v918 = vunpack.c.l.b16 %v847
    %v919 = vunpack.c.l.b16 %v848
    %v920 = vunpack.c.l.b16 %v849
    %v921 = vunpack.c.l.b16 %v850
    %v922 = vunpack.c.l.b16 %v851
    %v923 = vunpack.c.l.b16 %v852
    %v924 = vunpack.c.l.b16 %v853
    %v925 = vunpack.c.l.b16 %v854
    %v926 = vunpack.c.l.b16 %v855
    %v927 = vunpack.c.l.b16 %v856
    %v928 = vunpack.c.l.b16 %v857
    %v929 = vunpack.c.l.b16 %v858
    %v930 = vpack.c.b16 %v899, %v898
    %v931 = vpack.c.b16 %v901, %v900
    %v932 = vpack.c.b16 %v903, %v902
    %v933 = vpack.c.b16 %v905, %v904
    %v934 = vpack.c.b16 %v907, %v906
    %v935 = vpack.c.b16 %v909, %v908
    %v936 = vpack.c.b16 %v911, %v910
    %v937 = vpack.c.b16 %v913, %v912
    %v938 = vpack.c.b16 %v915, %v914
    %v939 = vpack.c.b16 %v917, %v916
    %v940 = vpack.c.b16 %v919, %v918
    %v941 = vpack.c.b16 %v921, %v920
    %v942 = vpack.c.b16 %v923, %v922
    %v943 = vpack.c.b16 %v925, %v924
    %v944 = vpack.c.b16 %v927, %v926
    %v945 = vpack.c.b16 %v929, %v928
    %962 = vmatprep.subr.bf16.mxu0 0
    %963 = vmatpush1.bf16.msra.mxu0 %v937
    %964 = vmatprep.subr.bf16.mxu0 0
    %965 = vmatpush1.bf16.msra.mxu0 %v936
    %966 = vmatprep.subr.bf16.mxu0 0
    %967 = vmatpush1.bf16.msra.mxu0 %v935
    %968 = vmatprep.subr.bf16.mxu0 0
    %969 = vmatpush1.bf16.msra.mxu0 %v934
    %970 = vmatprep.subr.bf16.mxu0 0
    %971 = vmatpush1.bf16.msra.mxu0 %v933
    %972 = vmatprep.subr.bf16.mxu0 0
    %973 = vmatpush1.bf16.msra.mxu0 %v932
    %974 = vmatprep.subr.bf16.mxu0 0
    %975 = vmatpush1.bf16.msra.mxu0 %v931
    %976 = vmatprep.subr.bf16.mxu0 0
    %977 = vmatpush1.bf16.msra.mxu0 %v930
    %978 = vmatprep.subr.bf16.mxu0 0
    %979 = vmatpush2.bf16.msra.mxu0 %v945
    %980 = vmatprep.subr.bf16.mxu0 0
    %981 = vmatpush2.bf16.msra.mxu0 %v944
    %982 = vmatprep.subr.bf16.mxu0 0
    %983 = vmatpush2.bf16.msra.mxu0 %v943
    %984 = vmatprep.subr.bf16.mxu0 0
    %985 = vmatpush2.bf16.msra.mxu0 %v942
    %986 = vmatprep.subr.bf16.mxu0 0
    %987 = vmatpush2.bf16.msra.mxu0 %v941
    %988 = vmatprep.subr.bf16.mxu0 0
    %989 = vmatpush2.bf16.msra.mxu0 %v940
    %990 = vmatprep.subr.bf16.mxu0 0
    %991 = vmatpush2.bf16.msra.mxu0 %v939
    %992 = vmatprep.subr.bf16.mxu0 0
    %993 = vmatpush2.bf16.msra.mxu0 %v938
    %994 = vmatprep.mubr.bf16.mxu0 %v826
    %995 = vmatmul.mubr.bf16.gmra.mxu0 %v825
    %v996 = vpop.f32.mrf.mxu0
    %v997 = vadd.f32 %v864, %v996
    %v998 = vpop.f32.mrf.mxu0
    %v999 = vpop.f32.mrf.mxu0
    %v1000 = vpop.f32.mrf.mxu0
    %1001 = vdwg.mxu0
    %v1002 = vld [vmem:[#allocation13] sm:$0xf]
    %v1003 = vld [vmem:[#allocation13 + $0x4] sm:$0xf]
    %v1004 = vld [vmem:[#allocation13 + $0x8] sm:$0xf]
    %v1005 = vld [vmem:[#allocation13 + $0xc] sm:$0xf]
    %v1006 = vld [vmem:[#allocation13 + $0x10] sm:$0xf]
    %v1007 = vld [vmem:[#allocation13 + $0x14] sm:$0xf]
    %v1008 = vld [vmem:[#allocation13 + $0x18] sm:$0xf]
    %v1009 = vld [vmem:[#allocation13 + $0x1c] sm:$0xf]
    %v1010 = vld [vmem:[#allocation13 + $0x20] sm:$0xf]
    %v1011 = vld [vmem:[#allocation13 + $0x24] sm:$0xf]
    %v1012 = vld [vmem:[#allocation13 + $0x28] sm:$0xf]
    %v1013 = vld [vmem:[#allocation13 + $0x2c] sm:$0xf]
    %v1014 = vld [vmem:[#allocation13 + $0x30] sm:$0xf]
    %v1015 = vld [vmem:[#allocation13 + $0x34] sm:$0xf]
    %v1016 = vld [vmem:[#allocation13 + $0x38] sm:$0xf]
    %v1017 = vld [vmem:[#allocation13 + $0x3c] sm:$0xf]
    %v1018 = vld [vmem:[#allocation13 + $0x40] sm:$0xf]
    %v1019 = vld [vmem:[#allocation13 + $0x44] sm:$0xf]
    %v1020 = vld [vmem:[#allocation13 + $0x48] sm:$0xf]
    %v1021 = vld [vmem:[#allocation13 + $0x4c] sm:$0xf]
    %v1022 = vld [vmem:[#allocation13 + $0x50] sm:$0xf]
    %v1023 = vld [vmem:[#allocation13 + $0x54] sm:$0xf]
    %v1024 = vld [vmem:[#allocation13 + $0x58] sm:$0xf]
    %v1025 = vld [vmem:[#allocation13 + $0x5c] sm:$0xf]
    %v1026 = vld [vmem:[#allocation13 + $0x60] sm:$0xf]
    %v1027 = vld [vmem:[#allocation13 + $0x64] sm:$0xf]
    %v1028 = vld [vmem:[#allocation13 + $0x68] sm:$0xf]
    %v1029 = vld [vmem:[#allocation13 + $0x6c] sm:$0xf]
    %v1030 = vld [vmem:[#allocation13 + $0x70] sm:$0xf]
    %v1031 = vld [vmem:[#allocation13 + $0x74] sm:$0xf]
    %v1032 = vld [vmem:[#allocation13 + $0x78] sm:$0xf]
    %v1033 = vld [vmem:[#allocation13 + $0x7c] sm:$0xf]
    %v1034 = vld [vmem:[%s12] sm:$0x1]
    %v1036 = vlaneseq
    %v1037 = vshrl.u32 %v1036, 7
    %v1038 = vsub.s32 0, %v1037
    %v1039 = vrot.slane %v1034, %v1038
    %v1073 = vunpack.c.l.b16 %v1002
    %v1074 = vunpack.c.l.b16 %v1003
    %v1075 = vunpack.c.l.b16 %v1004
    %v1076 = vunpack.c.l.b16 %v1005
    %v1077 = vunpack.c.l.b16 %v1006
    %v1078 = vunpack.c.l.b16 %v1007
    %v1079 = vunpack.c.l.b16 %v1008
    %v1080 = vunpack.c.l.b16 %v1009
    %v1081 = vunpack.c.l.b16 %v1010
    %v1082 = vunpack.c.l.b16 %v1011
    %v1083 = vunpack.c.l.b16 %v1012
    %v1084 = vunpack.c.l.b16 %v1013
    %v1085 = vunpack.c.l.b16 %v1014
    %v1086 = vunpack.c.l.b16 %v1015
    %v1087 = vunpack.c.l.b16 %v1016
    %v1088 = vunpack.c.l.b16 %v1017
    %v1089 = vunpack.c.l.b16 %v1018
    %v1090 = vunpack.c.l.b16 %v1019
    %v1091 = vunpack.c.l.b16 %v1020
    %v1092 = vunpack.c.l.b16 %v1021
    %v1093 = vunpack.c.l.b16 %v1022
    %v1094 = vunpack.c.l.b16 %v1023
    %v1095 = vunpack.c.l.b16 %v1024
    %v1096 = vunpack.c.l.b16 %v1025
    %v1097 = vunpack.c.l.b16 %v1026
    %v1098 = vunpack.c.l.b16 %v1027
    %v1099 = vunpack.c.l.b16 %v1028
    %v1100 = vunpack.c.l.b16 %v1029
    %v1101 = vunpack.c.l.b16 %v1030
    %v1102 = vunpack.c.l.b16 %v1031
    %v1103 = vunpack.c.l.b16 %v1032
    %v1104 = vunpack.c.l.b16 %v1033
    %v1105 = vpack.c.b16 %v1074, %v1073
    %v1106 = vpack.c.b16 %v1076, %v1075
    %v1107 = vpack.c.b16 %v1078, %v1077
    %v1108 = vpack.c.b16 %v1080, %v1079
    %v1109 = vpack.c.b16 %v1082, %v1081
    %v1110 = vpack.c.b16 %v1084, %v1083
    %v1111 = vpack.c.b16 %v1086, %v1085
    %v1112 = vpack.c.b16 %v1088, %v1087
    %v1113 = vpack.c.b16 %v1090, %v1089
    %v1114 = vpack.c.b16 %v1092, %v1091
    %v1115 = vpack.c.b16 %v1094, %v1093
    %v1116 = vpack.c.b16 %v1096, %v1095
    %v1117 = vpack.c.b16 %v1098, %v1097
    %v1118 = vpack.c.b16 %v1100, %v1099
    %v1119 = vpack.c.b16 %v1102, %v1101
    %v1120 = vpack.c.b16 %v1104, %v1103
    %1137 = vmatprep.subr.bf16.mxu0 0
    %1138 = vmatpush1.bf16.msra.mxu0 %v1112
    %1139 = vmatprep.subr.bf16.mxu0 0
    %1140 = vmatpush1.bf16.msra.mxu0 %v1111
    %1141 = vmatprep.subr.bf16.mxu0 0
    %1142 = vmatpush1.bf16.msra.mxu0 %v1110
    %1143 = vmatprep.subr.bf16.mxu0 0
    %1144 = vmatpush1.bf16.msra.mxu0 %v1109
    %1145 = vmatprep.subr.bf16.mxu0 0
    %1146 = vmatpush1.bf16.msra.mxu0 %v1108
    %1147 = vmatprep.subr.bf16.mxu0 0
    %1148 = vmatpush1.bf16.msra.mxu0 %v1107
    %1149 = vmatprep.subr.bf16.mxu0 0
    %1150 = vmatpush1.bf16.msra.mxu0 %v1106
    %1151 = vmatprep.subr.bf16.mxu0 0
    %1152 = vmatpush1.bf16.msra.mxu0 %v1105
    %1153 = vmatprep.subr.bf16.mxu0 0
    %1154 = vmatpush2.bf16.msra.mxu0 %v1120
    %1155 = vmatprep.subr.bf16.mxu0 0
    %1156 = vmatpush2.bf16.msra.mxu0 %v1119
    %1157 = vmatprep.subr.bf16.mxu0 0
    %1158 = vmatpush2.bf16.msra.mxu0 %v1118
    %1159 = vmatprep.subr.bf16.mxu0 0
    %1160 = vmatpush2.bf16.msra.mxu0 %v1117
    %1161 = vmatprep.subr.bf16.mxu0 0
    %1162 = vmatpush2.bf16.msra.mxu0 %v1116
    %1163 = vmatprep.subr.bf16.mxu0 0
    %1164 = vmatpush2.bf16.msra.mxu0 %v1115
    %1165 = vmatprep.subr.bf16.mxu0 0
    %1166 = vmatpush2.bf16.msra.mxu0 %v1114
    %1167 = vmatprep.subr.bf16.mxu0 0
    %1168 = vmatpush2.bf16.msra.mxu0 %v1113
    %1169 = vmatprep.mubr.bf16.mxu0 %v826
    %1170 = vmatmul.mubr.bf16.gmra.mxu0 %v825
    %v1171 = vpop.f32.mrf.mxu0
    %v1172 = vadd.f32 %v1039, %v1171
    %v1173 = vpop.f32.mrf.mxu0
    %v1174 = vpop.f32.mrf.mxu0
    %v1175 = vpop.f32.mrf.mxu0
    %1176 = vdwg.mxu0
    %v1177 = vld [vmem:[%s14] sm:$0x1]
    %v1178 = vld [vmem:[%s13] sm:$0x1]
    %v1180 = vlaneseq
    %v1181 = vshrl.u32 %v1180, 7
    %v1182 = vsub.s32 0, %v1181
    %v1183 = vrot.slane %v1177, %v1182
    %v1185 = vsub.f32 %v1183, %v1172
    %v1186 = vmax.f32 %v1185, 0.0
    %v1187 = vand.u32 2147483647, %v1185
    %v1188 = vsub.f32 0.0, %v1187
    %v1189 = vmul.f32 %v1188, 1.442695
    %v1190 = vpow.pop %v1189
    %v1191 = vadd.f32 %v1190, 1.0
    %v1192 = vlog2.pop %v1191
    %v1193 = vmul.f32 %v1192, 0.6931472
    %v1194 = vmul.f32 -0.5, %v1190
    %v1195 = vadd.f32 %v1194, 1.0
    %v1196 = vmul.f32 %v1195, %v1190
    %v1197 = vand.u32 2147483647, %v1190
    %vm1198 = vcmp.lt.f32.partialorder %v1197, 0.0004427343
    %v1199 = vsel %vm1198, %v1196, %v1193
    %v1200 = vadd.f32 %v1186, %v1199
    %v1201 = vsub.f32 %v1183, %v1200
    %v1203 = vlaneseq
    %v1204 = vshrl.u32 %v1203, 7
    %v1205 = vsub.s32 0, %v1204
    %v1206 = vrot.slane %v1178, %v1205
    %v1208 = vsub.f32 %v1201, %v1206
    %v1209 = vmax.f32 %v1208, 0.0
    %v1210 = vand.u32 2147483647, %v1208
    %v1211 = vsub.f32 0.0, %v1210
    %v1212 = vmul.f32 %v1211, 1.442695
    %v1213 = vpow.pop %v1212
    %v1214 = vadd.f32 %v1213, 1.0
    %v1215 = vlog2.pop %v1214
    %v1216 = vmul.f32 %v1215, 0.6931472
    %v1217 = vmul.f32 -0.5, %v1213
    %v1218 = vadd.f32 %v1217, 1.0
    %v1219 = vmul.f32 %v1218, %v1213
    %v1220 = vand.u32 2147483647, %v1213
    %vm1221 = vcmp.lt.f32.partialorder %v1220, 0.0004427343
    %v1222 = vsel %vm1221, %v1219, %v1216
    %v1223 = vadd.f32 %v1209, %v1222
    %v1224 = vadd.f32 %v1206, %v1223
    %1225 = vst [vmem:[#allocation14] sm:$0xff] %v997
    %1226 = vst [vmem:[#allocation15] sm:$0xff] %v1224
    // Predicated region
    $region90: #{tpu_custom_call.1} parent=1 // pred_check
      _
    $region91: #{tpu_custom_call.1} parent=1 // pred_check_branch
      %1228 = sbr.rel (0) target = $region93
    $region92: #{tpu_custom_call.1} parent=1 // pred_region
      %s1230 = ssub.s32 128, 128
      %1231 = vsyncadd [#allocation4], %s1230
      %s1233 = sshll.u32 [#allocation14], 4
      %s1234 = int_to_ptr.vmem [resolvable:$true] %s1233
      %1236 = dma.vmem_to_hbm [thread:$0]  %s1234, 128, %s15, [#allocation4]
    $region93: #{tpu_custom_call.1} parent=1 // pred_fallthru
      _
    // Predicated region
    $region94: #{tpu_custom_call.1} parent=1 // pred_check
      _
    $region95: #{tpu_custom_call.1} parent=1 // pred_check_branch
      %1238 = sbr.rel (0) target = $region97
    $region96: #{tpu_custom_call.1} parent=1 // pred_region
      %s1240 = ssub.s32 128, 128
      %1241 = vsyncadd [#allocation16], %s1240
      %s1243 = sshll.u32 [#allocation15], 4
      %s1244 = int_to_ptr.vmem [resolvable:$true] %s1243
      %1246 = dma.vmem_to_hbm [thread:$0]  %s1244, 128, %s16, [#allocation16]
    $region97: #{tpu_custom_call.1} parent=1 // pred_fallthru
      _
    // Predicated region
    $region98: #{tpu_custom_call.1} parent=1 // pred_check
      _
    $region99: #{tpu_custom_call.1} parent=1 // pred_check_branch
      %1248 = sbr.rel (0) target = $region101
    $region100: #{tpu_custom_call.1} parent=1 // pred_region
      %1249 = dma.done [#allocation4], 128
    $region101: #{tpu_custom_call.1} parent=1 // pred_fallthru
      _
    // Predicated region
    $region102: #{tpu_custom_call.1} parent=1 // pred_check
      _
    $region103: #{tpu_custom_call.1} parent=1 // pred_check_branch
      %1251 = sbr.rel (0) target = $region105
    $region104: #{tpu_custom_call.1} parent=1 // pred_region
      %1252 = dma.done [#allocation16], 128
    $region105: #{tpu_custom_call.1} parent=1 // pred_fallthru
      _
    %1253 = vsyncpa [#allocation3], 1
    %1254 = vsyncpa [#allocation6], 1
    %1255 = vsyncpa [#allocation9], 1
    %1256 = vsyncpa [#allocation12], 1
    %1257 = vsyncpa [#allocation4], 1
    %1258 = vsyncpa [#allocation16], 1

</llo_original>
